<compile_context>
chip_gen: v7x
topology: tpu7x:2x2x1
jax: 0.10.0
libtpu: 0.0.40
codegen_flags: <defaults>
</compile_context>

<pallas_src>
import functools

import jax
import jax.numpy as jnp
from jax import lax
from jax.experimental import pallas as pl
from jax.experimental.pallas import tpu as pltpu

BN_EPS = 1e-5
HIDDEN = (128, 256, 128, 64)   # fixed by the module definition
VEC_ROWS = 9                   # 4 gammas + 4 betas + final bias


def _round_up(n, m):
    return ((n + m - 1) // m) * m


def _slab_layout(input_dims, out_dim):
    """Row/col layout of the packed bf16 weight slab.

    Each layer's (K, N) is padded to a multiple of 128 so every in-kernel
    slice of the slab is (sublane, lane)-tile aligned.  Zero-padded rows /
    columns are mathematically inert: zero weights produce zero pre-BN
    activations, and zero gamma/beta keep them zero through BN + ReLU.
    Returns (layout[(row_off, K_pad, N_pad) x5], rows, width, in_pad, out_pad).
    """
    in_pad = _round_up(max(input_dims, 1), 128)
    out_pad = _round_up(max(out_dim, 1), 128)
    k_pad = (in_pad, 128, 256, 128, 128)    # layer-4 output 64 -> padded to 128
    n_pad = (128, 256, 128, 128, out_pad)
    offs, rows = [], 0
    for k in k_pad:
        offs.append(rows)
        rows += k
    width = max(256, out_pad)
    layout = tuple((offs[i], k_pad[i], n_pad[i]) for i in range(5))
    return layout, rows, width, in_pad, out_pad


def _bf16_epilogue_supported():
    """bf16 VPU exists on v6e/v7x; keep the BN/ReLU epilogue in f32 on <= v5."""
    try:
        kind = jax.devices()[0].device_kind.lower()
    except Exception:
        return True
    return not any(t in kind for t in ("v2", "v3", "v4", "v5"))


def _linear_bn_relu(h, w, gamma, beta, bf16_epilogue):
    """Linear (bias-free) -> BatchNorm1d (batch stats) -> ReLU on VMEM tiles."""
    y = jnp.dot(h, w, preferred_element_type=jnp.float32)     # MXU, f32 acc
    inv_b = jnp.float32(1.0 / y.shape[0])
    s1 = jnp.sum(y, axis=0, keepdims=True)                    # single-pass stats
    s2 = jnp.sum(y * y, axis=0, keepdims=True)
    mu = s1 * inv_b
    var = jnp.maximum(s2 * inv_b - mu * mu, 0.0)               # cancellation guard
    scale = gamma * lax.rsqrt(var + BN_EPS)                    # (1,N), EUP rsqrt
    shift = beta - mu * scale                                  # (1,N)
    if bf16_epilogue:
        # cast first, ReLU in bf16 (identical result; half the vreg traffic)
        y = jnp.maximum((y * scale + shift).astype(jnp.bfloat16), 0.0)
    else:
        y = jnp.maximum(y * scale + shift, 0.0).astype(jnp.bfloat16)
    return y                                                   # bf16 -> next MXU


def iqn_kernel(x_ref, w_ref, vec_ref, o_ref, *, layout, bf16_epilogue):
    h = x_ref[...].astype(jnp.bfloat16)                        # (B, in_pad)
    for i in range(4):
        off, k, n = layout[i]
        h = _linear_bn_relu(
            h,
            w_ref[off:off + k, 0:n],
            vec_ref[i:i + 1, 0:n],
            vec_ref[4 + i:5 + i, 0:n],
            bf16_epilogue,
        )
    # final Linear with bias; no BN / ReLU
    off, k, n = layout[4]
    out = jnp.dot(h, w_ref[off:off + k, 0:n],
                  preferred_element_type=jnp.float32)
    out = out + vec_ref[8:9, 0:n]
    o_ref[...] = out.astype(o_ref.dtype)


def init_params(key, input_dims, action_size, agent_id):
    """Deterministic parameter init.

    Returns (w_slab, vec):
      w_slab: (rows, width) bf16 -- w1..w5 packed at tile-aligned row offsets,
              zero padded to the layout in _slab_layout.
      vec:    (9, width) f32 -- rows 0-3 gamma, 4-7 beta, 8 final bias
              (zero in padded lanes).
    Pre-BN biases are not materialized (they cancel in h - mean).  Random
    gamma/beta (instead of PyTorch's 1/0 init) so the affine path is exercised
    by the correctness check.
    """
    out_dim = action_size * agent_id
    layout, rows, width, _, _ = _slab_layout(input_dims, out_dim)
    true_dims = [input_dims] + list(HIDDEN) + [out_dim]

    slab = jnp.zeros((rows, width), jnp.float32)
    vec = jnp.zeros((VEC_ROWS, width), jnp.float32)
    for i in range(5):
        fan_in, fan_out = true_dims[i], true_dims[i + 1]
        off = layout[i][0]
        key, kw, kb, kg = jax.random.split(key, 4)
        bound = 1.0 / float(fan_in) ** 0.5
        w = jax.random.uniform(kw, (fan_in, fan_out), jnp.float32, -bound, bound)
        slab = slab.at[off:off + fan_in, :fan_out].set(w)
        if i < 4:
            gamma = jax.random.uniform(kg, (fan_out,), jnp.float32, 0.5, 1.5)
            beta = jax.random.uniform(kb, (fan_out,), jnp.float32, -0.5, 0.5)
            vec = vec.at[i, :fan_out].set(gamma)
            vec = vec.at[4 + i, :fan_out].set(beta)
        else:
            b = jax.random.uniform(kb, (fan_out,), jnp.float32, -bound, bound)
            vec = vec.at[8, :fan_out].set(b)
    return slab.astype(jnp.bfloat16), vec


@functools.partial(jax.jit, static_argnames=("out_dim",))
def iqn_forward(x, w_slab, vec, *, out_dim):
    batch, input_dims = x.shape
    layout, _, _, in_pad, out_pad = _slab_layout(input_dims, out_dim)
    if input_dims != in_pad:
        x = jnp.pad(x, ((0, 0), (0, in_pad - input_dims)))

    kernel = functools.partial(iqn_kernel, layout=layout,
                               bf16_epilogue=_bf16_epilogue_supported())
    vmem = pl.BlockSpec(memory_space=pltpu.MemorySpace.VMEM)

    flops = 2 * batch * sum(k * n for _, k, n in layout)
    bytes_accessed = (x.size * x.dtype.itemsize
                      + w_slab.size * w_slab.dtype.itemsize
                      + vec.size * vec.dtype.itemsize
                      + batch * out_pad * 4)
    cost = pl.CostEstimate(flops=flops,
                           transcendentals=sum(n for _, _, n in layout[:4]),
                           bytes_accessed=bytes_accessed)

    out = pl.pallas_call(
        kernel,
        out_shape=jax.ShapeDtypeStruct((batch, out_pad), jnp.float32),
        in_specs=[vmem, vmem, vmem],     # x, packed weight slab, packed vectors
        out_specs=vmem,                  # lane-dense 128-multiple output
        cost_estimate=cost,
    )(x, w_slab, vec)
    return out[:, :out_dim]


def _reference(x, w_slab, vec, input_dims, out_dim):
    """Pure-JAX reference: same bf16-rounded matmul operands, f32 math."""
    layout, _, _, _, _ = _slab_layout(input_dims, out_dim)
    true_dims = [input_dims] + list(HIDDEN) + [out_dim]
    h = x.astype(jnp.float32)
    for i in range(4):
        off = layout[i][0]
        fi, fo = true_dims[i], true_dims[i + 1]
        w = w_slab[off:off + fi, :fo].astype(jnp.float32)
        h = h.astype(jnp.bfloat16).astype(jnp.float32) @ w
        mu = jnp.mean(h, axis=0, keepdims=True)
        var = jnp.mean((h - mu) ** 2, axis=0, keepdims=True)
        h = (h - mu) / jnp.sqrt(var + BN_EPS) * vec[i, :fo] + vec[4 + i, :fo]
        h = jnp.maximum(h, 0.0)
    off = layout[4][0]
    w5 = w_slab[off:off + true_dims[4], :out_dim].astype(jnp.float32)
    return h.astype(jnp.bfloat16).astype(jnp.float32) @ w5 + vec[8, :out_dim]


if __name__ == "__main__":
    # Small problem consistent with the module:
    #   m_agents=4, p_preys=2  ->  state_dims = (4+2)*2 + 2 = 14
    #   action_size=5, agent_id=2  ->  output dim = 10
    m_agents, p_preys, action_size, agent_id = 4, 2, 5, 2
    input_dims = (m_agents + p_preys) * 2 + p_preys
    out_dim = action_size * agent_id
    batch = 32   # stack agents / quantile samples here for real workloads

    key = jax.random.PRNGKey(0)
    kx, kp = jax.random.split(key)
    x = jax.random.normal(kx, (batch, input_dims), jnp.float32)
    w_slab, vec = init_params(kp, input_dims, action_size, agent_id)

    out = iqn_forward(x, w_slab, vec, out_dim=out_dim)
    jax.block_until_ready(out)

    ref = _reference(x, w_slab, vec, input_dims, out_dim)
    assert out.shape == (batch, out_dim)
    assert jnp.allclose(out, ref, atol=1e-3, rtol=1e-3), "mismatch vs reference"

    print("KERNEL_OK")
</pallas_src>

<mosaic_0001>
module attributes {stable_mosaic.version = 11 : i64} {
  func.func @iqn_kernel(%arg0: memref<32x128xf32, #tpu.memory_space<vmem>>, %arg1: memref<768x256xbf16, #tpu.memory_space<vmem>>, %arg2: memref<9x256xf32, #tpu.memory_space<vmem>>, %arg3: memref<32x128xf32, #tpu.memory_space<vmem>>) attributes {dimension_semantics = [], scalar_prefetch = 0 : i64, scratch_operands = 0 : i64, tpu.core_type = #tpu.core_type<tc>} {
    %c0 = arith.constant 0 : index
    %c0_0 = arith.constant 0 : index
    %0 = vector.load %arg0[%c0, %c0_0] : memref<32x128xf32, #tpu.memory_space<vmem>>, vector<32x128xf32>
    %1 = arith.truncf %0 : vector<32x128xf32> to vector<32x128xbf16>
    %c0_1 = arith.constant 0 : index
    %c0_2 = arith.constant 0 : index
    %2 = vector.load %arg1[%c0_1, %c0_2] : memref<768x256xbf16, #tpu.memory_space<vmem>>, vector<128x128xbf16>
    %c0_3 = arith.constant 0 : index
    %c0_4 = arith.constant 0 : index
    %3 = vector.load %arg2[%c0_3, %c0_4] : memref<9x256xf32, #tpu.memory_space<vmem>>, vector<1x128xf32>
    %c4 = arith.constant 4 : index
    %c0_5 = arith.constant 0 : index
    %4 = vector.load %arg2[%c4, %c0_5] : memref<9x256xf32, #tpu.memory_space<vmem>>, vector<1x128xf32>
    %cst = arith.constant dense<0.000000e+00> : vector<32x128xf32>
    %5 = tpu.matmul %1, %2, %cst {dimension_numbers = #tpu.dot_dimension_numbers<[1], [0], [0], [1], [0, 0, 1, 1], [], []>} : vector<32x128xbf16>, vector<128x128xbf16>, vector<32x128xf32> -> vector<32x128xf32>
    %cst_6 = arith.constant dense<0.000000e+00> : vector<128xf32>
    %6 = vector.multi_reduction <add>, %5, %cst_6 [0] : vector<32x128xf32> to vector<128xf32>
    %7 = vector.shape_cast %6 : vector<128xf32> to vector<1x128xf32>
    %8 = arith.mulf %5, %5 : vector<32x128xf32>
    %cst_7 = arith.constant dense<0.000000e+00> : vector<128xf32>
    %9 = vector.multi_reduction <add>, %8, %cst_7 [0] : vector<32x128xf32> to vector<128xf32>
    %10 = vector.shape_cast %9 : vector<128xf32> to vector<1x128xf32>
    %cst_8 = arith.constant 3.125000e-02 : f32
    %11 = vector.broadcast %cst_8 : f32 to vector<1x128xf32>
    %12 = arith.mulf %7, %11 : vector<1x128xf32>
    %cst_9 = arith.constant 3.125000e-02 : f32
    %13 = vector.broadcast %cst_9 : f32 to vector<1x128xf32>
    %14 = arith.mulf %10, %13 : vector<1x128xf32>
    %15 = arith.mulf %12, %12 : vector<1x128xf32>
    %16 = arith.subf %14, %15 : vector<1x128xf32>
    %cst_10 = arith.constant 0.000000e+00 : f32
    %17 = vector.broadcast %cst_10 : f32 to vector<1x128xf32>
    %18 = arith.maximumf %16, %17 : vector<1x128xf32>
    %cst_11 = arith.constant 9.99999974E-6 : f32
    %19 = vector.broadcast %cst_11 : f32 to vector<1x128xf32>
    %20 = arith.addf %18, %19 : vector<1x128xf32>
    %21 = math.rsqrt %20 : vector<1x128xf32>
    %22 = arith.mulf %3, %21 : vector<1x128xf32>
    %23 = arith.mulf %12, %22 : vector<1x128xf32>
    %24 = arith.subf %4, %23 : vector<1x128xf32>
    %25 = vector.broadcast %22 : vector<1x128xf32> to vector<32x128xf32>
    %26 = arith.mulf %5, %25 : vector<32x128xf32>
    %27 = vector.broadcast %24 : vector<1x128xf32> to vector<32x128xf32>
    %28 = arith.addf %26, %27 : vector<32x128xf32>
    %29 = arith.truncf %28 : vector<32x128xf32> to vector<32x128xbf16>
    %cst_12 = arith.constant 0.000000e+00 : bf16
    %30 = vector.broadcast %cst_12 : bf16 to vector<32x128xbf16>
    %31 = arith.maximumf %29, %30 : vector<32x128xbf16>
    %c128 = arith.constant 128 : index
    %c0_13 = arith.constant 0 : index
    %32 = vector.load %arg1[%c128, %c0_13] : memref<768x256xbf16, #tpu.memory_space<vmem>>, vector<128x256xbf16>
    %c1 = arith.constant 1 : index
    %c0_14 = arith.constant 0 : index
    %33 = vector.load %arg2[%c1, %c0_14] : memref<9x256xf32, #tpu.memory_space<vmem>>, vector<1x256xf32>
    %c5 = arith.constant 5 : index
    %c0_15 = arith.constant 0 : index
    %34 = vector.load %arg2[%c5, %c0_15] : memref<9x256xf32, #tpu.memory_space<vmem>>, vector<1x256xf32>
    %cst_16 = arith.constant dense<0.000000e+00> : vector<32x256xf32>
    %35 = tpu.matmul %31, %32, %cst_16 {dimension_numbers = #tpu.dot_dimension_numbers<[1], [0], [0], [1], [0, 0, 1, 1], [], []>} : vector<32x128xbf16>, vector<128x256xbf16>, vector<32x256xf32> -> vector<32x256xf32>
    %cst_17 = arith.constant dense<0.000000e+00> : vector<256xf32>
    %36 = vector.multi_reduction <add>, %35, %cst_17 [0] : vector<32x256xf32> to vector<256xf32>
    %37 = vector.shape_cast %36 : vector<256xf32> to vector<1x256xf32>
    %38 = arith.mulf %35, %35 : vector<32x256xf32>
    %cst_18 = arith.constant dense<0.000000e+00> : vector<256xf32>
    %39 = vector.multi_reduction <add>, %38, %cst_18 [0] : vector<32x256xf32> to vector<256xf32>
    %40 = vector.shape_cast %39 : vector<256xf32> to vector<1x256xf32>
    %cst_19 = arith.constant 3.125000e-02 : f32
    %41 = vector.broadcast %cst_19 : f32 to vector<1x256xf32>
    %42 = arith.mulf %37, %41 : vector<1x256xf32>
    %cst_20 = arith.constant 3.125000e-02 : f32
    %43 = vector.broadcast %cst_20 : f32 to vector<1x256xf32>
    %44 = arith.mulf %40, %43 : vector<1x256xf32>
    %45 = arith.mulf %42, %42 : vector<1x256xf32>
    %46 = arith.subf %44, %45 : vector<1x256xf32>
    %cst_21 = arith.constant 0.000000e+00 : f32
    %47 = vector.broadcast %cst_21 : f32 to vector<1x256xf32>
    %48 = arith.maximumf %46, %47 : vector<1x256xf32>
    %cst_22 = arith.constant 9.99999974E-6 : f32
    %49 = vector.broadcast %cst_22 : f32 to vector<1x256xf32>
    %50 = arith.addf %48, %49 : vector<1x256xf32>
    %51 = math.rsqrt %50 : vector<1x256xf32>
    %52 = arith.mulf %33, %51 : vector<1x256xf32>
    %53 = arith.mulf %42, %52 : vector<1x256xf32>
    %54 = arith.subf %34, %53 : vector<1x256xf32>
    %55 = vector.broadcast %52 : vector<1x256xf32> to vector<32x256xf32>
    %56 = arith.mulf %35, %55 : vector<32x256xf32>
    %57 = vector.broadcast %54 : vector<1x256xf32> to vector<32x256xf32>
    %58 = arith.addf %56, %57 : vector<32x256xf32>
    %59 = arith.truncf %58 : vector<32x256xf32> to vector<32x256xbf16>
    %cst_23 = arith.constant 0.000000e+00 : bf16
    %60 = vector.broadcast %cst_23 : bf16 to vector<32x256xbf16>
    %61 = arith.maximumf %59, %60 : vector<32x256xbf16>
    %c256 = arith.constant 256 : index
    %c0_24 = arith.constant 0 : index
    %62 = vector.load %arg1[%c256, %c0_24] : memref<768x256xbf16, #tpu.memory_space<vmem>>, vector<256x128xbf16>
    %c2 = arith.constant 2 : index
    %c0_25 = arith.constant 0 : index
    %63 = vector.load %arg2[%c2, %c0_25] : memref<9x256xf32, #tpu.memory_space<vmem>>, vector<1x128xf32>
    %c6 = arith.constant 6 : index
    %c0_26 = arith.constant 0 : index
    %64 = vector.load %arg2[%c6, %c0_26] : memref<9x256xf32, #tpu.memory_space<vmem>>, vector<1x128xf32>
    %cst_27 = arith.constant dense<0.000000e+00> : vector<32x128xf32>
    %65 = tpu.matmul %61, %62, %cst_27 {dimension_numbers = #tpu.dot_dimension_numbers<[1], [0], [0], [1], [0, 0, 1, 1], [], []>} : vector<32x256xbf16>, vector<256x128xbf16>, vector<32x128xf32> -> vector<32x128xf32>
    %cst_28 = arith.constant dense<0.000000e+00> : vector<128xf32>
    %66 = vector.multi_reduction <add>, %65, %cst_28 [0] : vector<32x128xf32> to vector<128xf32>
    %67 = vector.shape_cast %66 : vector<128xf32> to vector<1x128xf32>
    %68 = arith.mulf %65, %65 : vector<32x128xf32>
    %cst_29 = arith.constant dense<0.000000e+00> : vector<128xf32>
    %69 = vector.multi_reduction <add>, %68, %cst_29 [0] : vector<32x128xf32> to vector<128xf32>
    %70 = vector.shape_cast %69 : vector<128xf32> to vector<1x128xf32>
    %cst_30 = arith.constant 3.125000e-02 : f32
    %71 = vector.broadcast %cst_30 : f32 to vector<1x128xf32>
    %72 = arith.mulf %67, %71 : vector<1x128xf32>
    %cst_31 = arith.constant 3.125000e-02 : f32
    %73 = vector.broadcast %cst_31 : f32 to vector<1x128xf32>
    %74 = arith.mulf %70, %73 : vector<1x128xf32>
    %75 = arith.mulf %72, %72 : vector<1x128xf32>
    %76 = arith.subf %74, %75 : vector<1x128xf32>
    %cst_32 = arith.constant 0.000000e+00 : f32
    %77 = vector.broadcast %cst_32 : f32 to vector<1x128xf32>
    %78 = arith.maximumf %76, %77 : vector<1x128xf32>
    %cst_33 = arith.constant 9.99999974E-6 : f32
    %79 = vector.broadcast %cst_33 : f32 to vector<1x128xf32>
    %80 = arith.addf %78, %79 : vector<1x128xf32>
    %81 = math.rsqrt %80 : vector<1x128xf32>
    %82 = arith.mulf %63, %81 : vector<1x128xf32>
    %83 = arith.mulf %72, %82 : vector<1x128xf32>
    %84 = arith.subf %64, %83 : vector<1x128xf32>
    %85 = vector.broadcast %82 : vector<1x128xf32> to vector<32x128xf32>
    %86 = arith.mulf %65, %85 : vector<32x128xf32>
    %87 = vector.broadcast %84 : vector<1x128xf32> to vector<32x128xf32>
    %88 = arith.addf %86, %87 : vector<32x128xf32>
    %89 = arith.truncf %88 : vector<32x128xf32> to vector<32x128xbf16>
    %cst_34 = arith.constant 0.000000e+00 : bf16
    %90 = vector.broadcast %cst_34 : bf16 to vector<32x128xbf16>
    %91 = arith.maximumf %89, %90 : vector<32x128xbf16>
    %c512 = arith.constant 512 : index
    %c0_35 = arith.constant 0 : index
    %92 = vector.load %arg1[%c512, %c0_35] : memref<768x256xbf16, #tpu.memory_space<vmem>>, vector<128x128xbf16>
    %c3 = arith.constant 3 : index
    %c0_36 = arith.constant 0 : index
    %93 = vector.load %arg2[%c3, %c0_36] : memref<9x256xf32, #tpu.memory_space<vmem>>, vector<1x128xf32>
    %c7 = arith.constant 7 : index
    %c0_37 = arith.constant 0 : index
    %94 = vector.load %arg2[%c7, %c0_37] : memref<9x256xf32, #tpu.memory_space<vmem>>, vector<1x128xf32>
    %cst_38 = arith.constant dense<0.000000e+00> : vector<32x128xf32>
    %95 = tpu.matmul %91, %92, %cst_38 {dimension_numbers = #tpu.dot_dimension_numbers<[1], [0], [0], [1], [0, 0, 1, 1], [], []>} : vector<32x128xbf16>, vector<128x128xbf16>, vector<32x128xf32> -> vector<32x128xf32>
    %cst_39 = arith.constant dense<0.000000e+00> : vector<128xf32>
    %96 = vector.multi_reduction <add>, %95, %cst_39 [0] : vector<32x128xf32> to vector<128xf32>
    %97 = vector.shape_cast %96 : vector<128xf32> to vector<1x128xf32>
    %98 = arith.mulf %95, %95 : vector<32x128xf32>
    %cst_40 = arith.constant dense<0.000000e+00> : vector<128xf32>
    %99 = vector.multi_reduction <add>, %98, %cst_40 [0] : vector<32x128xf32> to vector<128xf32>
    %100 = vector.shape_cast %99 : vector<128xf32> to vector<1x128xf32>
    %cst_41 = arith.constant 3.125000e-02 : f32
    %101 = vector.broadcast %cst_41 : f32 to vector<1x128xf32>
    %102 = arith.mulf %97, %101 : vector<1x128xf32>
    %cst_42 = arith.constant 3.125000e-02 : f32
    %103 = vector.broadcast %cst_42 : f32 to vector<1x128xf32>
    %104 = arith.mulf %100, %103 : vector<1x128xf32>
    %105 = arith.mulf %102, %102 : vector<1x128xf32>
    %106 = arith.subf %104, %105 : vector<1x128xf32>
    %cst_43 = arith.constant 0.000000e+00 : f32
    %107 = vector.broadcast %cst_43 : f32 to vector<1x128xf32>
    %108 = arith.maximumf %106, %107 : vector<1x128xf32>
    %cst_44 = arith.constant 9.99999974E-6 : f32
    %109 = vector.broadcast %cst_44 : f32 to vector<1x128xf32>
    %110 = arith.addf %108, %109 : vector<1x128xf32>
    %111 = math.rsqrt %110 : vector<1x128xf32>
    %112 = arith.mulf %93, %111 : vector<1x128xf32>
    %113 = arith.mulf %102, %112 : vector<1x128xf32>
    %114 = arith.subf %94, %113 : vector<1x128xf32>
    %115 = vector.broadcast %112 : vector<1x128xf32> to vector<32x128xf32>
    %116 = arith.mulf %95, %115 : vector<32x128xf32>
    %117 = vector.broadcast %114 : vector<1x128xf32> to vector<32x128xf32>
    %118 = arith.addf %116, %117 : vector<32x128xf32>
    %119 = arith.truncf %118 : vector<32x128xf32> to vector<32x128xbf16>
    %cst_45 = arith.constant 0.000000e+00 : bf16
    %120 = vector.broadcast %cst_45 : bf16 to vector<32x128xbf16>
    %121 = arith.maximumf %119, %120 : vector<32x128xbf16>
    %c640 = arith.constant 640 : index
    %c0_46 = arith.constant 0 : index
    %122 = vector.load %arg1[%c640, %c0_46] : memref<768x256xbf16, #tpu.memory_space<vmem>>, vector<128x128xbf16>
    %cst_47 = arith.constant dense<0.000000e+00> : vector<32x128xf32>
    %123 = tpu.matmul %121, %122, %cst_47 {dimension_numbers = #tpu.dot_dimension_numbers<[1], [0], [0], [1], [0, 0, 1, 1], [], []>} : vector<32x128xbf16>, vector<128x128xbf16>, vector<32x128xf32> -> vector<32x128xf32>
    %c8 = arith.constant 8 : index
    %c0_48 = arith.constant 0 : index
    %124 = vector.load %arg2[%c8, %c0_48] : memref<9x256xf32, #tpu.memory_space<vmem>>, vector<1x128xf32>
    %125 = vector.broadcast %124 : vector<1x128xf32> to vector<32x128xf32>
    %126 = arith.addf %123, %125 : vector<32x128xf32>
    %c0_49 = arith.constant 0 : index
    %c0_50 = arith.constant 0 : index
    %127 = vector.load %arg3[%c0_49, %c0_50] : memref<32x128xf32, #tpu.memory_space<vmem>>, vector<32x128xf32>
    tpu.vector_store %arg3[%c0_49, %c0_50], %126 {strides = array<i32>} : memref<32x128xf32, #tpu.memory_space<vmem>>, vector<32x128xf32>,
    return
  }
}

</mosaic_0001>

<llo_original>
// kernel: iqn_forward.1
$region0: #{iqn_forward.1}
  #allocation0 [shape = 'u32[]', space=smem, size = 0x4, offset = 0x4, fixed_abs, tag = 'smem constant byte address 0x4 - core index']
  #allocation1 [shape = 'u32[144,128]{1,0:T(1,128)}', space=vmem, size = 0x12000, scoped, tag = 'internal scratch']
  %s0 = inlined_call_operand.vmem [shape: f32[32,128], index: 0, kind: input, shape index: {}]
  %s1 = inlined_call_operand.hbm [shape: bf16[768,256], index: 1, kind: input, shape index: {}]
  %s2 = inlined_call_operand.vmem [shape: f32[9,256], index: 2, kind: input, shape index: {}]
  %s3 = inlined_call_operand.vmem [shape: f32[32,128], index: 3, kind: output, shape index: {}]
  %s4 = sld [smem:[#allocation0]]
  $region26: #{iqn_forward.1} parent=0
    _
  %s6 = ssub.s32 1, %s4
  %s7 = scalar_select 0, %s6, %s4
  $region1: #{iqn_forward.1} parent=0
    #allocation2 [shape = 'u8[393216]{0}', space=vmem, size = 0x60000, scoped, tag = 'input window, operand 1, single buffered']
    #allocation3 [shape = 's32[1]{0}', space=sflag, size = 0x4, scoped, tag = 'scoped memory for iqn_forward.1']
    %8 = vsyncpa [#allocation3], 0
    // Predicated region
    $region2: #{iqn_forward.1} parent=1 // pred_check
      _
    $region3: #{iqn_forward.1} parent=1 // pred_check_branch
      %10 = sbr.rel (0) target = $region5
    $region4: #{iqn_forward.1} parent=1 // pred_region
      _
    $region5: #{iqn_forward.1} parent=1 // pred_fallthru
      _
    // Predicated region
    $region6: #{iqn_forward.1} parent=1 // pred_check
      _
    $region7: #{iqn_forward.1} parent=1 // pred_check_branch
      %12 = sbr.rel (0) target = $region9
    $region8: #{iqn_forward.1} parent=1 // pred_region
      %s14 = ssub.s32 12288, 12288
      %15 = vsyncadd [#allocation3], %s14
      %s16 = sshll.u32 [#allocation2], 4
      %s17 = int_to_ptr.vmem [resolvable:$true] %s16
      %22 = dma.hbm_to_vmem [thread:$0]  %s1, 12288, %s17, [#allocation3], 128, 128, 8
    $region9: #{iqn_forward.1} parent=1 // pred_fallthru
      _
    // Predicated region
    $region10: #{iqn_forward.1} parent=1 // pred_check
      _
    $region11: #{iqn_forward.1} parent=1 // pred_check_branch
      %24 = sbr.rel (0) target = $region13
    $region12: #{iqn_forward.1} parent=1 // pred_region
      _
    $region13: #{iqn_forward.1} parent=1 // pred_fallthru
      _
    // Predicated region
    $region14: #{iqn_forward.1} parent=1 // pred_check
      _
    $region15: #{iqn_forward.1} parent=1 // pred_check_branch
      %26 = sbr.rel (0) target = $region17
    $region16: #{iqn_forward.1} parent=1 // pred_region
      %27 = dma.done [#allocation3], 12288
    $region17: #{iqn_forward.1} parent=1 // pred_fallthru
      _
    %v29 = vld [vmem:[%s0] sm:$0xff]
    %v30 = vld [vmem:[%s0 + $0x8] sm:$0xff]
    %v31 = vld [vmem:[%s0 + $0x10] sm:$0xff]
    %v32 = vld [vmem:[%s0 + $0x18] sm:$0xff]
    %v33 = vpack.c.bf16 %v30, %v29
    %v34 = vpack.c.bf16 %v32, %v31
    %v35 = vld [vmem:[#allocation2] sm:$0xf]
    %v36 = vld [vmem:[#allocation2 + $0x8] sm:$0xf]
    %v37 = vld [vmem:[#allocation2 + $0x10] sm:$0xf]
    %v38 = vld [vmem:[#allocation2 + $0x18] sm:$0xf]
    %v39 = vld [vmem:[#allocation2 + $0x20] sm:$0xf]
    %v40 = vld [vmem:[#allocation2 + $0x28] sm:$0xf]
    %v41 = vld [vmem:[#allocation2 + $0x30] sm:$0xf]
    %v42 = vld [vmem:[#allocation2 + $0x38] sm:$0xf]
    %v43 = vld [vmem:[#allocation2 + $0x40] sm:$0xf]
    %v44 = vld [vmem:[#allocation2 + $0x48] sm:$0xf]
    %v45 = vld [vmem:[#allocation2 + $0x50] sm:$0xf]
    %v46 = vld [vmem:[#allocation2 + $0x58] sm:$0xf]
    %v47 = vld [vmem:[#allocation2 + $0x60] sm:$0xf]
    %v48 = vld [vmem:[#allocation2 + $0x68] sm:$0xf]
    %v49 = vld [vmem:[#allocation2 + $0x70] sm:$0xf]
    %v50 = vld [vmem:[#allocation2 + $0x78] sm:$0xf]
    %v51 = vld [vmem:[%s2] ss:$0 sm:$0xff]
    %v52 = vld [vmem:[%s2 + $0x4] ss:$0 sm:$0xff]
    %v69 = vunpack.c.l.b16 %v35
    %v70 = vunpack.c.l.b16 %v36
    %v71 = vunpack.c.l.b16 %v37
    %v72 = vunpack.c.l.b16 %v38
    %v73 = vunpack.c.l.b16 %v39
    %v74 = vunpack.c.l.b16 %v40
    %v75 = vunpack.c.l.b16 %v41
    %v76 = vunpack.c.l.b16 %v42
    %v77 = vunpack.c.l.b16 %v43
    %v78 = vunpack.c.l.b16 %v44
    %v79 = vunpack.c.l.b16 %v45
    %v80 = vunpack.c.l.b16 %v46
    %v81 = vunpack.c.l.b16 %v47
    %v82 = vunpack.c.l.b16 %v48
    %v83 = vunpack.c.l.b16 %v49
    %v84 = vunpack.c.l.b16 %v50
    %v85 = vpack.c.b16 %v70, %v69
    %v86 = vpack.c.b16 %v72, %v71
    %v87 = vpack.c.b16 %v74, %v73
    %v88 = vpack.c.b16 %v76, %v75
    %v89 = vpack.c.b16 %v78, %v77
    %v90 = vpack.c.b16 %v80, %v79
    %v91 = vpack.c.b16 %v82, %v81
    %v92 = vpack.c.b16 %v84, %v83
    %101 = vmatprep.subr.bf16.mxu0 0
    %102 = vmatpush1.bf16.msra.mxu0 %v85
    %103 = vmatprep.subr.bf16.mxu0 0
    %104 = vmatpush1.bf16.msra.mxu0 %v86
    %105 = vmatprep.subr.bf16.mxu0 0
    %106 = vmatpush1.bf16.msra.mxu0 %v87
    %107 = vmatprep.subr.bf16.mxu0 0
    %108 = vmatpush1.bf16.msra.mxu0 %v88
    %109 = vmatprep.subr.bf16.mxu0 0
    %110 = vmatpush1.bf16.msra.mxu0 %v89
    %111 = vmatprep.subr.bf16.mxu0 0
    %112 = vmatpush1.bf16.msra.mxu0 %v90
    %113 = vmatprep.subr.bf16.mxu0 0
    %114 = vmatpush1.bf16.msra.mxu0 %v91
    %115 = vmatprep.subr.bf16.mxu0 0
    %116 = vmatpush1.bf16.msra.mxu0 %v92
    %117 = vmatprep.subr.bf16.mxu0 0
    %118 = vmatpush1.bf16.msra.mxu0 0
    %119 = vmatprep.subr.bf16.mxu0 0
    %120 = vmatpush1.bf16.msra.mxu0 0
    %121 = vmatprep.subr.bf16.mxu0 0
    %122 = vmatpush1.bf16.msra.mxu0 0
    %123 = vmatprep.subr.bf16.mxu0 0
    %124 = vmatpush1.bf16.msra.mxu0 0
    %125 = vmatprep.subr.bf16.mxu0 0
    %126 = vmatpush1.bf16.msra.mxu0 0
    %127 = vmatprep.subr.bf16.mxu0 0
    %128 = vmatpush1.bf16.msra.mxu0 0
    %129 = vmatprep.subr.bf16.mxu0 0
    %130 = vmatpush1.bf16.msra.mxu0 0
    %131 = vmatprep.subr.bf16.mxu0 0
    %132 = vmatpush1.bf16.msra.mxu0 0
    %133 = vmatprep.mubr.bf16.mxu0 0
    %134 = vmatmul.mubr.bf16.gmra.mrb[0].mxu0 %v33
    %v135 = vpop.f32.mrb[0].mxu0
    %v136 = vadd.f32 0.0, %v135
    %v137 = vpop.f32.mrb[0].mxu0
    %v138 = vpop.f32.mrb[0].mxu0
    %v139 = vadd.f32 0.0, %v138
    %v140 = vpop.f32.mrb[0].mxu0
    %141 = vmatprep.mubr.bf16.mxu0 0
    %142 = vmatmul.mubr.bf16.gmra.mrb[0].mxu0 %v34
    %v143 = vpop.f32.mrb[0].mxu0
    %v144 = vadd.f32 0.0, %v143
    %v145 = vpop.f32.mrb[0].mxu0
    %v146 = vpop.f32.mrb[0].mxu0
    %v147 = vadd.f32 0.0, %v146
    %v148 = vpop.f32.mrb[0].mxu0
    %149 = vdwg.mxu0
    %v150 = vadd.f32 %v136, %v139
    %v151 = vadd.f32 %v150, %v144
    %v152 = vadd.f32 %v151, %v147
    %v153 = vrot.slane %v152, 4
    %v154 = vadd.f32 %v152, %v153
    %v155 = vrot.slane %v154, 2
    %v156 = vadd.f32 %v154, %v155
    %v157 = vrot.slane %v156, 1
    %v158 = vadd.f32 %v156, %v157
    %v159 = vmul.f32 %v136, %v136
    %v160 = vmul.f32 %v139, %v139
    %v161 = vmul.f32 %v144, %v144
    %v162 = vmul.f32 %v147, %v147
    %v163 = vadd.f32 %v159, %v160
    %v164 = vadd.f32 %v163, %v161
    %v165 = vadd.f32 %v164, %v162
    %v166 = vrot.slane %v165, 4
    %v167 = vadd.f32 %v165, %v166
    %v168 = vrot.slane %v167, 2
    %v169 = vadd.f32 %v167, %v168
    %v170 = vrot.slane %v169, 1
    %v171 = vadd.f32 %v169, %v170
    %v172 = vmul.f32 %v158, 0.03125
    %v173 = vmul.f32 %v171, 0.03125
    %v174 = vmul.f32 %v172, %v172
    %v175 = vsub.f32 %v173, %v174
    %v176 = vmax.f32 %v175, 0.0
    %v177 = vadd.f32 %v176, 1e-05
    %v178 = vrsqrt.pop %v177
    %v179 = vmul.f32 %v51, %v178
    %v180 = vmul.f32 %v172, %v179
    %v181 = vsub.f32 %v52, %v180
    %v182 = vmul.f32 %v136, %v179
    %v183 = vmul.f32 %v139, %v179
    %v184 = vmul.f32 %v144, %v179
    %v185 = vmul.f32 %v147, %v179
    %v186 = vadd.f32 %v182, %v181
    %v187 = vadd.f32 %v183, %v181
    %v188 = vadd.f32 %v184, %v181
    %v189 = vadd.f32 %v185, %v181
    %v190 = vpack.c.bf16 %v187, %v186
    %v191 = vpack.c.bf16 %v189, %v188
    %v192 = vmax.bf16 %v190, 0
    %v193 = vmax.bf16 %v191, 0
    %v194 = vld [vmem:[#allocation2 + $0x80] sm:$0xff]
    %v195 = vld [vmem:[#allocation2 + $0x88] sm:$0xff]
    %v196 = vld [vmem:[#allocation2 + $0x90] sm:$0xff]
    %v197 = vld [vmem:[#allocation2 + $0x98] sm:$0xff]
    %v198 = vld [vmem:[#allocation2 + $0xa0] sm:$0xff]
    %v199 = vld [vmem:[#allocation2 + $0xa8] sm:$0xff]
    %v200 = vld [vmem:[#allocation2 + $0xb0] sm:$0xff]
    %v201 = vld [vmem:[#allocation2 + $0xb8] sm:$0xff]
    %v202 = vld [vmem:[#allocation2 + $0xc0] sm:$0xff]
    %v203 = vld [vmem:[#allocation2 + $0xc8] sm:$0xff]
    %v204 = vld [vmem:[#allocation2 + $0xd0] sm:$0xff]
    %v205 = vld [vmem:[#allocation2 + $0xd8] sm:$0xff]
    %v206 = vld [vmem:[#allocation2 + $0xe0] sm:$0xff]
    %v207 = vld [vmem:[#allocation2 + $0xe8] sm:$0xff]
    %v208 = vld [vmem:[#allocation2 + $0xf0] sm:$0xff]
    %v209 = vld [vmem:[#allocation2 + $0xf8] sm:$0xff]
    %s210 = scalar_lea.vmem %s2, 1
    %v211 = vld [vmem:[%s210] ss:$8 sm:$0x3]
    %s212 = scalar_lea.vmem %s2, 5
    %v213 = vld [vmem:[%s212] ss:$8 sm:$0x3]
    %v230 = vunpack.c.l.b16 %v194
    %v231 = vunpack.c.h.b16 %v194
    %v232 = vunpack.c.l.b16 %v195
    %v233 = vunpack.c.h.b16 %v195
    %v234 = vunpack.c.l.b16 %v196
    %v235 = vunpack.c.h.b16 %v196
    %v236 = vunpack.c.l.b16 %v197
    %v237 = vunpack.c.h.b16 %v197
    %v238 = vunpack.c.l.b16 %v198
    %v239 = vunpack.c.h.b16 %v198
    %v240 = vunpack.c.l.b16 %v199
    %v241 = vunpack.c.h.b16 %v199
    %v242 = vunpack.c.l.b16 %v200
    %v243 = vunpack.c.h.b16 %v200
    %v244 = vunpack.c.l.b16 %v201
    %v245 = vunpack.c.h.b16 %v201
    %v246 = vunpack.c.l.b16 %v202
    %v247 = vunpack.c.h.b16 %v202
    %v248 = vunpack.c.l.b16 %v203
    %v249 = vunpack.c.h.b16 %v203
    %v250 = vunpack.c.l.b16 %v204
    %v251 = vunpack.c.h.b16 %v204
    %v252 = vunpack.c.l.b16 %v205
    %v253 = vunpack.c.h.b16 %v205
    %v254 = vunpack.c.l.b16 %v206
    %v255 = vunpack.c.h.b16 %v206
    %v256 = vunpack.c.l.b16 %v207
    %v257 = vunpack.c.h.b16 %v207
    %v258 = vunpack.c.l.b16 %v208
    %v259 = vunpack.c.h.b16 %v208
    %v260 = vunpack.c.l.b16 %v209
    %v261 = vunpack.c.h.b16 %v209
    %v262 = vpack.c.b16 %v232, %v230
    %v263 = vpack.c.b16 %v233, %v231
    %v264 = vpack.c.b16 %v236, %v234
    %v265 = vpack.c.b16 %v237, %v235
    %v266 = vpack.c.b16 %v240, %v238
    %v267 = vpack.c.b16 %v241, %v239
    %v268 = vpack.c.b16 %v244, %v242
    %v269 = vpack.c.b16 %v245, %v243
    %v270 = vpack.c.b16 %v248, %v246
    %v271 = vpack.c.b16 %v249, %v247
    %v272 = vpack.c.b16 %v252, %v250
    %v273 = vpack.c.b16 %v253, %v251
    %v274 = vpack.c.b16 %v256, %v254
    %v275 = vpack.c.b16 %v257, %v255
    %v276 = vpack.c.b16 %v260, %v258
    %v277 = vpack.c.b16 %v261, %v259
    %294 = vmatprep.subr.bf16.mxu0 %v263
    %295 = vmatpush1.bf16.msra.mxu0 %v262
    %296 = vmatprep.subr.bf16.mxu0 %v265
    %297 = vmatpush1.bf16.msra.mxu0 %v264
    %298 = vmatprep.subr.bf16.mxu0 %v267
    %299 = vmatpush1.bf16.msra.mxu0 %v266
    %300 = vmatprep.subr.bf16.mxu0 %v269
    %301 = vmatpush1.bf16.msra.mxu0 %v268
    %302 = vmatprep.subr.bf16.mxu0 %v271
    %303 = vmatpush1.bf16.msra.mxu0 %v270
    %304 = vmatprep.subr.bf16.mxu0 %v273
    %305 = vmatpush1.bf16.msra.mxu0 %v272
    %306 = vmatprep.subr.bf16.mxu0 %v275
    %307 = vmatpush1.bf16.msra.mxu0 %v274
    %308 = vmatprep.subr.bf16.mxu0 %v277
    %309 = vmatpush1.bf16.msra.mxu0 %v276
    %310 = vmatprep.subr.bf16.mxu0 0
    %311 = vmatpush1.bf16.msra.mxu0 0
    %312 = vmatprep.subr.bf16.mxu0 0
    %313 = vmatpush1.bf16.msra.mxu0 0
    %314 = vmatprep.subr.bf16.mxu0 0
    %315 = vmatpush1.bf16.msra.mxu0 0
    %316 = vmatprep.subr.bf16.mxu0 0
    %317 = vmatpush1.bf16.msra.mxu0 0
    %318 = vmatprep.subr.bf16.mxu0 0
    %319 = vmatpush1.bf16.msra.mxu0 0
    %320 = vmatprep.subr.bf16.mxu0 0
    %321 = vmatpush1.bf16.msra.mxu0 0
    %322 = vmatprep.subr.bf16.mxu0 0
    %323 = vmatpush1.bf16.msra.mxu0 0
    %324 = vmatprep.subr.bf16.mxu0 0
    %325 = vmatpush1.bf16.msra.mxu0 0
    %326 = vmatprep.mubr.bf16.mxu0 0
    %327 = vmatmul.mubr.bf16.gmra.mrb[0].mxu0 %v192
    %v328 = vpop.f32.mrb[0].mxu0
    %v329 = vadd.f32 0.0, %v328
    %v330 = vpop.f32.mrb[0].mxu0
    %v331 = vadd.f32 0.0, %v330
    %v332 = vpop.f32.mrb[0].mxu0
    %v333 = vadd.f32 0.0, %v332
    %v334 = vpop.f32.mrb[0].mxu0
    %v335 = vadd.f32 0.0, %v334
    %336 = vmatprep.mubr.bf16.mxu0 0
    %337 = vmatmul.mubr.bf16.gmra.mrb[0].mxu0 %v193
    %v338 = vpop.f32.mrb[0].mxu0
    %v339 = vadd.f32 0.0, %v338
    %v340 = vpop.f32.mrb[0].mxu0
    %v341 = vadd.f32 0.0, %v340
    %v342 = vpop.f32.mrb[0].mxu0
    %v343 = vadd.f32 0.0, %v342
    %v344 = vpop.f32.mrb[0].mxu0
    %v345 = vadd.f32 0.0, %v344
    %346 = vdwg.mxu0
    %v347 = vadd.f32 %v329, %v333
    %v348 = vadd.f32 %v347, %v339
    %v349 = vadd.f32 %v348, %v343
    %v350 = vrot.slane %v349, 4
    %v351 = vadd.f32 %v349, %v350
    %v352 = vrot.slane %v351, 2
    %v353 = vadd.f32 %v351, %v352
    %v354 = vrot.slane %v353, 1
    %v355 = vadd.f32 %v353, %v354
    %v356 = vadd.f32 %v331, %v335
    %v357 = vadd.f32 %v356, %v341
    %v358 = vadd.f32 %v357, %v345
    %v359 = vrot.slane %v358, 4
    %v360 = vadd.f32 %v358, %v359
    %v361 = vrot.slane %v360, 2
    %v362 = vadd.f32 %v360, %v361
    %v363 = vrot.slane %v362, 1
    %v364 = vadd.f32 %v362, %v363
    %v365 = vmul.f32 %v329, %v329
    %v366 = vmul.f32 %v331, %v331
    %v367 = vmul.f32 %v333, %v333
    %v368 = vmul.f32 %v335, %v335
    %v369 = vmul.f32 %v339, %v339
    %v370 = vmul.f32 %v341, %v341
    %v371 = vmul.f32 %v343, %v343
    %v372 = vmul.f32 %v345, %v345
    %v373 = vadd.f32 %v365, %v367
    %v374 = vadd.f32 %v373, %v369
    %v375 = vadd.f32 %v374, %v371
    %v376 = vrot.slane %v375, 4
    %v377 = vadd.f32 %v375, %v376
    %v378 = vrot.slane %v377, 2
    %v379 = vadd.f32 %v377, %v378
    %v380 = vrot.slane %v379, 1
    %v381 = vadd.f32 %v379, %v380
    %v382 = vadd.f32 %v366, %v368
    %v383 = vadd.f32 %v382, %v370
    %v384 = vadd.f32 %v383, %v372
    %v385 = vrot.slane %v384, 4
    %v386 = vadd.f32 %v384, %v385
    %v387 = vrot.slane %v386, 2
    %v388 = vadd.f32 %v386, %v387
    %v389 = vrot.slane %v388, 1
    %v390 = vadd.f32 %v388, %v389
    %v391 = vmul.f32 %v355, 0.03125
    %v392 = vmul.f32 %v364, 0.03125
    %v393 = vmul.f32 %v381, 0.03125
    %v394 = vmul.f32 %v390, 0.03125
    %v395 = vmul.f32 %v391, %v391
    %v396 = vmul.f32 %v392, %v392
    %v397 = vsub.f32 %v393, %v395
    %v398 = vsub.f32 %v394, %v396
    %v399 = vmax.f32 %v397, 0.0
    %v400 = vmax.f32 %v398, 0.0
    %v401 = vadd.f32 %v399, 1e-05
    %v402 = vadd.f32 %v400, 1e-05
    %v403 = vrsqrt.pop %v401
    %v404 = vrsqrt.pop %v402
    %v407 = vcombine.low %v403, %v404
    %v409 = vunpack.c.l.s4 1966171168
    %v410 = vunpack.c.0.s8 %v409
    %v411 = vlaneseq
    %v412 = vshrl.u32 %v411, 7
    %v413 = vsub.s32 %v410, %v412
    %v414 = vrot.slane %v407, %v413
    %v416 = vunpack.c.l.s4 1966171168
    %v417 = vunpack.c.0.s8 %v416
    %v418 = vlaneseq
    %v419 = vshrl.u32 %v418, 7
    %v420 = vsub.s32 %v417, %v419
    %v421 = vrot.slane %v414, %v420
    %v423 = vmul.f32 %v211, %v421
    %v425 = vlaneseq
    %v426 = vshrl.u32 %v425, 7
    %v427 = vsub.s32 0, %v426
    %v428 = vrot.slane %v423, %v427
    %v429 = vlaneseq
    %v430 = vshrl.u32 %v429, 7
    %v431 = vsub.s32 1, %v430
    %v432 = vrot.slane %v423, %v431
    %v435 = vmul.f32 %v391, %v428
    %v436 = vmul.f32 %v392, %v432
    %v439 = vcombine.low %v435, %v436
    %v441 = vunpack.c.l.s4 1966171168
    %v442 = vunpack.c.0.s8 %v441
    %v443 = vlaneseq
    %v444 = vshrl.u32 %v443, 7
    %v445 = vsub.s32 %v442, %v444
    %v446 = vrot.slane %v439, %v445
    %v448 = vunpack.c.l.s4 1966171168
    %v449 = vunpack.c.0.s8 %v448
    %v450 = vlaneseq
    %v451 = vshrl.u32 %v450, 7
    %v452 = vsub.s32 %v449, %v451
    %v453 = vrot.slane %v446, %v452
    %v455 = vsub.f32 %v213, %v453
    %v456 = vmul.f32 %v329, %v428
    %v457 = vmul.f32 %v331, %v432
    %v458 = vmul.f32 %v333, %v428
    %v459 = vmul.f32 %v335, %v432
    %v460 = vmul.f32 %v339, %v428
    %v461 = vmul.f32 %v341, %v432
    %v462 = vmul.f32 %v343, %v428
    %v463 = vmul.f32 %v345, %v432
    %v465 = vlaneseq
    %v466 = vshrl.u32 %v465, 7
    %v467 = vsub.s32 0, %v466
    %v468 = vrot.slane %v455, %v467
    %v469 = vlaneseq
    %v470 = vshrl.u32 %v469, 7
    %v471 = vsub.s32 1, %v470
    %v472 = vrot.slane %v455, %v471
    %v475 = vadd.f32 %v456, %v468
    %v476 = vadd.f32 %v457, %v472
    %v477 = vadd.f32 %v458, %v468
    %v478 = vadd.f32 %v459, %v472
    %v479 = vadd.f32 %v460, %v468
    %v480 = vadd.f32 %v461, %v472
    %v481 = vadd.f32 %v462, %v468
    %v482 = vadd.f32 %v463, %v472
    %v483 = vpack.c.bf16 %v477, %v475
    %v484 = vpack.c.bf16 %v478, %v476
    %v485 = vpack.c.bf16 %v481, %v479
    %v486 = vpack.c.bf16 %v482, %v480
    %v487 = vmax.bf16 %v483, 0
    %v488 = vmax.bf16 %v484, 0
    %v489 = vmax.bf16 %v485, 0
    %v490 = vmax.bf16 %v486, 0
    %v491 = vld [vmem:[#allocation2 + $0x100] sm:$0xf]
    %v492 = vld [vmem:[#allocation2 + $0x108] sm:$0xf]
    %v493 = vld [vmem:[#allocation2 + $0x110] sm:$0xf]
    %v494 = vld [vmem:[#allocation2 + $0x118] sm:$0xf]
    %v495 = vld [vmem:[#allocation2 + $0x120] sm:$0xf]
    %v496 = vld [vmem:[#allocation2 + $0x128] sm:$0xf]
    %v497 = vld [vmem:[#allocation2 + $0x130] sm:$0xf]
    %v498 = vld [vmem:[#allocation2 + $0x138] sm:$0xf]
    %v499 = vld [vmem:[#allocation2 + $0x140] sm:$0xf]
    %v500 = vld [vmem:[#allocation2 + $0x148] sm:$0xf]
    %v501 = vld [vmem:[#allocation2 + $0x150] sm:$0xf]
    %v502 = vld [vmem:[#allocation2 + $0x158] sm:$0xf]
    %v503 = vld [vmem:[#allocation2 + $0x160] sm:$0xf]
    %v504 = vld [vmem:[#allocation2 + $0x168] sm:$0xf]
    %v505 = vld [vmem:[#allocation2 + $0x170] sm:$0xf]
    %v506 = vld [vmem:[#allocation2 + $0x178] sm:$0xf]
    %v507 = vld [vmem:[#allocation2 + $0x180] sm:$0xf]
    %v508 = vld [vmem:[#allocation2 + $0x188] sm:$0xf]
    %v509 = vld [vmem:[#allocation2 + $0x190] sm:$0xf]
    %v510 = vld [vmem:[#allocation2 + $0x198] sm:$0xf]
    %v511 = vld [vmem:[#allocation2 + $0x1a0] sm:$0xf]
    %v512 = vld [vmem:[#allocation2 + $0x1a8] sm:$0xf]
    %v513 = vld [vmem:[#allocation2 + $0x1b0] sm:$0xf]
    %v514 = vld [vmem:[#allocation2 + $0x1b8] sm:$0xf]
    %v515 = vld [vmem:[#allocation2 + $0x1c0] sm:$0xf]
    %v516 = vld [vmem:[#allocation2 + $0x1c8] sm:$0xf]
    %v517 = vld [vmem:[#allocation2 + $0x1d0] sm:$0xf]
    %v518 = vld [vmem:[#allocation2 + $0x1d8] sm:$0xf]
    %v519 = vld [vmem:[#allocation2 + $0x1e0] sm:$0xf]
    %v520 = vld [vmem:[#allocation2 + $0x1e8] sm:$0xf]
    %v521 = vld [vmem:[#allocation2 + $0x1f0] sm:$0xf]
    %v522 = vld [vmem:[#allocation2 + $0x1f8] sm:$0xf]
    %v523 = vld [vmem:[%s2 + $0x2] ss:$0 sm:$0xff]
    %v524 = vld [vmem:[%s2 + $0x6] ss:$0 sm:$0xff]
    %v557 = vunpack.c.l.b16 %v491
    %v558 = vunpack.c.l.b16 %v492
    %v559 = vunpack.c.l.b16 %v493
    %v560 = vunpack.c.l.b16 %v494
    %v561 = vunpack.c.l.b16 %v495
    %v562 = vunpack.c.l.b16 %v496
    %v563 = vunpack.c.l.b16 %v497
    %v564 = vunpack.c.l.b16 %v498
    %v565 = vunpack.c.l.b16 %v499
    %v566 = vunpack.c.l.b16 %v500
    %v567 = vunpack.c.l.b16 %v501
    %v568 = vunpack.c.l.b16 %v502
    %v569 = vunpack.c.l.b16 %v503
    %v570 = vunpack.c.l.b16 %v504
    %v571 = vunpack.c.l.b16 %v505
    %v572 = vunpack.c.l.b16 %v506
    %v573 = vunpack.c.l.b16 %v507
    %v574 = vunpack.c.l.b16 %v508
    %v575 = vunpack.c.l.b16 %v509
    %v576 = vunpack.c.l.b16 %v510
    %v577 = vunpack.c.l.b16 %v511
    %v578 = vunpack.c.l.b16 %v512
    %v579 = vunpack.c.l.b16 %v513
    %v580 = vunpack.c.l.b16 %v514
    %v581 = vunpack.c.l.b16 %v515
    %v582 = vunpack.c.l.b16 %v516
    %v583 = vunpack.c.l.b16 %v517
    %v584 = vunpack.c.l.b16 %v518
    %v585 = vunpack.c.l.b16 %v519
    %v586 = vunpack.c.l.b16 %v520
    %v587 = vunpack.c.l.b16 %v521
    %v588 = vunpack.c.l.b16 %v522
    %v589 = vpack.c.b16 %v558, %v557
    %v590 = vpack.c.b16 %v560, %v559
    %v591 = vpack.c.b16 %v562, %v561
    %v592 = vpack.c.b16 %v564, %v563
    %v593 = vpack.c.b16 %v566, %v565
    %v594 = vpack.c.b16 %v568, %v567
    %v595 = vpack.c.b16 %v570, %v569
    %v596 = vpack.c.b16 %v572, %v571
    %v597 = vpack.c.b16 %v574, %v573
    %v598 = vpack.c.b16 %v576, %v575
    %v599 = vpack.c.b16 %v578, %v577
    %v600 = vpack.c.b16 %v580, %v579
    %v601 = vpack.c.b16 %v582, %v581
    %v602 = vpack.c.b16 %v584, %v583
    %v603 = vpack.c.b16 %v586, %v585
    %v604 = vpack.c.b16 %v588, %v587
    %621 = vmatprep.subr.bf16.mxu0 0
    %622 = vmatpush1.bf16.msra.mxu0 %v589
    %623 = vmatprep.subr.bf16.mxu0 0
    %624 = vmatpush1.bf16.msra.mxu0 %v590
    %625 = vmatprep.subr.bf16.mxu0 0
    %626 = vmatpush1.bf16.msra.mxu0 %v591
    %627 = vmatprep.subr.bf16.mxu0 0
    %628 = vmatpush1.bf16.msra.mxu0 %v592
    %629 = vmatprep.subr.bf16.mxu0 0
    %630 = vmatpush1.bf16.msra.mxu0 %v593
    %631 = vmatprep.subr.bf16.mxu0 0
    %632 = vmatpush1.bf16.msra.mxu0 %v594
    %633 = vmatprep.subr.bf16.mxu0 0
    %634 = vmatpush1.bf16.msra.mxu0 %v595
    %635 = vmatprep.subr.bf16.mxu0 0
    %636 = vmatpush1.bf16.msra.mxu0 %v596
    %637 = vmatprep.subr.bf16.mxu0 0
    %638 = vmatpush1.bf16.msra.mxu0 %v597
    %639 = vmatprep.subr.bf16.mxu0 0
    %640 = vmatpush1.bf16.msra.mxu0 %v598
    %641 = vmatprep.subr.bf16.mxu0 0
    %642 = vmatpush1.bf16.msra.mxu0 %v599
    %643 = vmatprep.subr.bf16.mxu0 0
    %644 = vmatpush1.bf16.msra.mxu0 %v600
    %645 = vmatprep.subr.bf16.mxu0 0
    %646 = vmatpush1.bf16.msra.mxu0 %v601
    %647 = vmatprep.subr.bf16.mxu0 0
    %648 = vmatpush1.bf16.msra.mxu0 %v602
    %649 = vmatprep.subr.bf16.mxu0 0
    %650 = vmatpush1.bf16.msra.mxu0 %v603
    %651 = vmatprep.subr.bf16.mxu0 0
    %652 = vmatpush1.bf16.msra.mxu0 %v604
    %653 = vmatprep.mubr.bf16.mxu0 %v488
    %654 = vmatmul.mubr.bf16.gmra.mrb[0].mxu0 %v487
    %v655 = vpop.f32.mrb[0].mxu0
    %v656 = vadd.f32 0.0, %v655
    %v657 = vpop.f32.mrb[0].mxu0
    %v658 = vpop.f32.mrb[0].mxu0
    %v659 = vadd.f32 0.0, %v658
    %v660 = vpop.f32.mrb[0].mxu0
    %661 = vmatprep.mubr.bf16.mxu0 %v490
    %662 = vmatmul.mubr.bf16.gmra.mrb[0].mxu0 %v489
    %v663 = vpop.f32.mrb[0].mxu0
    %v664 = vadd.f32 0.0, %v663
    %v665 = vpop.f32.mrb[0].mxu0
    %v666 = vpop.f32.mrb[0].mxu0
    %v667 = vadd.f32 0.0, %v666
    %v668 = vpop.f32.mrb[0].mxu0
    %669 = vdwg.mxu0
    %v670 = vadd.f32 %v656, %v659
    %v671 = vadd.f32 %v670, %v664
    %v672 = vadd.f32 %v671, %v667
    %v673 = vrot.slane %v672, 4
    %v674 = vadd.f32 %v672, %v673
    %v675 = vrot.slane %v674, 2
    %v676 = vadd.f32 %v674, %v675
    %v677 = vrot.slane %v676, 1
    %v678 = vadd.f32 %v676, %v677
    %v679 = vmul.f32 %v656, %v656
    %v680 = vmul.f32 %v659, %v659
    %v681 = vmul.f32 %v664, %v664
    %v682 = vmul.f32 %v667, %v667
    %v683 = vadd.f32 %v679, %v680
    %v684 = vadd.f32 %v683, %v681
    %v685 = vadd.f32 %v684, %v682
    %v686 = vrot.slane %v685, 4
    %v687 = vadd.f32 %v685, %v686
    %v688 = vrot.slane %v687, 2
    %v689 = vadd.f32 %v687, %v688
    %v690 = vrot.slane %v689, 1
    %v691 = vadd.f32 %v689, %v690
    %v692 = vmul.f32 %v678, 0.03125
    %v693 = vmul.f32 %v691, 0.03125
    %v694 = vmul.f32 %v692, %v692
    %v695 = vsub.f32 %v693, %v694
    %v696 = vmax.f32 %v695, 0.0
    %v697 = vadd.f32 %v696, 1e-05
    %v698 = vrsqrt.pop %v697
    %v699 = vmul.f32 %v523, %v698
    %v700 = vmul.f32 %v692, %v699
    %v701 = vsub.f32 %v524, %v700
    %v702 = vmul.f32 %v656, %v699
    %v703 = vmul.f32 %v659, %v699
    %v704 = vmul.f32 %v664, %v699
    %v705 = vmul.f32 %v667, %v699
    %v706 = vadd.f32 %v702, %v701
    %v707 = vadd.f32 %v703, %v701
    %v708 = vadd.f32 %v704, %v701
    %v709 = vadd.f32 %v705, %v701
    %v710 = vpack.c.bf16 %v707, %v706
    %v711 = vpack.c.bf16 %v709, %v708
    %v712 = vmax.bf16 %v710, 0
    %v713 = vmax.bf16 %v711, 0
    %v714 = vld [vmem:[#allocation2 + $0x200] sm:$0xf]
    %v715 = vld [vmem:[#allocation2 + $0x208] sm:$0xf]
    %v716 = vld [vmem:[#allocation2 + $0x210] sm:$0xf]
    %v717 = vld [vmem:[#allocation2 + $0x218] sm:$0xf]
    %v718 = vld [vmem:[#allocation2 + $0x220] sm:$0xf]
    %v719 = vld [vmem:[#allocation2 + $0x228] sm:$0xf]
    %v720 = vld [vmem:[#allocation2 + $0x230] sm:$0xf]
    %v721 = vld [vmem:[#allocation2 + $0x238] sm:$0xf]
    %v722 = vld [vmem:[#allocation2 + $0x240] sm:$0xf]
    %v723 = vld [vmem:[#allocation2 + $0x248] sm:$0xf]
    %v724 = vld [vmem:[#allocation2 + $0x250] sm:$0xf]
    %v725 = vld [vmem:[#allocation2 + $0x258] sm:$0xf]
    %v726 = vld [vmem:[#allocation2 + $0x260] sm:$0xf]
    %v727 = vld [vmem:[#allocation2 + $0x268] sm:$0xf]
    %v728 = vld [vmem:[#allocation2 + $0x270] sm:$0xf]
    %v729 = vld [vmem:[#allocation2 + $0x278] sm:$0xf]
    %v730 = vld [vmem:[%s2 + $0x3] ss:$0 sm:$0xff]
    %v731 = vld [vmem:[%s2 + $0x7] ss:$0 sm:$0xff]
    %v748 = vunpack.c.l.b16 %v714
    %v749 = vunpack.c.l.b16 %v715
    %v750 = vunpack.c.l.b16 %v716
    %v751 = vunpack.c.l.b16 %v717
    %v752 = vunpack.c.l.b16 %v718
    %v753 = vunpack.c.l.b16 %v719
    %v754 = vunpack.c.l.b16 %v720
    %v755 = vunpack.c.l.b16 %v721
    %v756 = vunpack.c.l.b16 %v722
    %v757 = vunpack.c.l.b16 %v723
    %v758 = vunpack.c.l.b16 %v724
    %v759 = vunpack.c.l.b16 %v725
    %v760 = vunpack.c.l.b16 %v726
    %v761 = vunpack.c.l.b16 %v727
    %v762 = vunpack.c.l.b16 %v728
    %v763 = vunpack.c.l.b16 %v729
    %v764 = vpack.c.b16 %v749, %v748
    %v765 = vpack.c.b16 %v751, %v750
    %v766 = vpack.c.b16 %v753, %v752
    %v767 = vpack.c.b16 %v755, %v754
    %v768 = vpack.c.b16 %v757, %v756
    %v769 = vpack.c.b16 %v759, %v758
    %v770 = vpack.c.b16 %v761, %v760
    %v771 = vpack.c.b16 %v763, %v762
    %780 = vmatprep.subr.bf16.mxu0 0
    %781 = vmatpush1.bf16.msra.mxu0 %v764
    %782 = vmatprep.subr.bf16.mxu0 0
    %783 = vmatpush1.bf16.msra.mxu0 %v765
    %784 = vmatprep.subr.bf16.mxu0 0
    %785 = vmatpush1.bf16.msra.mxu0 %v766
    %786 = vmatprep.subr.bf16.mxu0 0
    %787 = vmatpush1.bf16.msra.mxu0 %v767
    %788 = vmatprep.subr.bf16.mxu0 0
    %789 = vmatpush1.bf16.msra.mxu0 %v768
    %790 = vmatprep.subr.bf16.mxu0 0
    %791 = vmatpush1.bf16.msra.mxu0 %v769
    %792 = vmatprep.subr.bf16.mxu0 0
    %793 = vmatpush1.bf16.msra.mxu0 %v770
    %794 = vmatprep.subr.bf16.mxu0 0
    %795 = vmatpush1.bf16.msra.mxu0 %v771
    %796 = vmatprep.subr.bf16.mxu0 0
    %797 = vmatpush1.bf16.msra.mxu0 0
    %798 = vmatprep.subr.bf16.mxu0 0
    %799 = vmatpush1.bf16.msra.mxu0 0
    %800 = vmatprep.subr.bf16.mxu0 0
    %801 = vmatpush1.bf16.msra.mxu0 0
    %802 = vmatprep.subr.bf16.mxu0 0
    %803 = vmatpush1.bf16.msra.mxu0 0
    %804 = vmatprep.subr.bf16.mxu0 0
    %805 = vmatpush1.bf16.msra.mxu0 0
    %806 = vmatprep.subr.bf16.mxu0 0
    %807 = vmatpush1.bf16.msra.mxu0 0
    %808 = vmatprep.subr.bf16.mxu0 0
    %809 = vmatpush1.bf16.msra.mxu0 0
    %810 = vmatprep.subr.bf16.mxu0 0
    %811 = vmatpush1.bf16.msra.mxu0 0
    %812 = vmatprep.mubr.bf16.mxu0 0
    %813 = vmatmul.mubr.bf16.gmra.mrb[0].mxu0 %v712
    %v814 = vpop.f32.mrb[0].mxu0
    %v815 = vadd.f32 0.0, %v814
    %v816 = vpop.f32.mrb[0].mxu0
    %v817 = vpop.f32.mrb[0].mxu0
    %v818 = vadd.f32 0.0, %v817
    %v819 = vpop.f32.mrb[0].mxu0
    %820 = vmatprep.mubr.bf16.mxu0 0
    %821 = vmatmul.mubr.bf16.gmra.mrb[0].mxu0 %v713
    %v822 = vpop.f32.mrb[0].mxu0
    %v823 = vadd.f32 0.0, %v822
    %v824 = vpop.f32.mrb[0].mxu0
    %v825 = vpop.f32.mrb[0].mxu0
    %v826 = vadd.f32 0.0, %v825
    %v827 = vpop.f32.mrb[0].mxu0
    %828 = vdwg.mxu0
    %v829 = vadd.f32 %v815, %v818
    %v830 = vadd.f32 %v829, %v823
    %v831 = vadd.f32 %v830, %v826
    %v832 = vrot.slane %v831, 4
    %v833 = vadd.f32 %v831, %v832
    %v834 = vrot.slane %v833, 2
    %v835 = vadd.f32 %v833, %v834
    %v836 = vrot.slane %v835, 1
    %v837 = vadd.f32 %v835, %v836
    %v838 = vmul.f32 %v815, %v815
    %v839 = vmul.f32 %v818, %v818
    %v840 = vmul.f32 %v823, %v823
    %v841 = vmul.f32 %v826, %v826
    %v842 = vadd.f32 %v838, %v839
    %v843 = vadd.f32 %v842, %v840
    %v844 = vadd.f32 %v843, %v841
    %v845 = vrot.slane %v844, 4
    %v846 = vadd.f32 %v844, %v845
    %v847 = vrot.slane %v846, 2
    %v848 = vadd.f32 %v846, %v847
    %v849 = vrot.slane %v848, 1
    %v850 = vadd.f32 %v848, %v849
    %v851 = vmul.f32 %v837, 0.03125
    %v852 = vmul.f32 %v850, 0.03125
    %v853 = vmul.f32 %v851, %v851
    %v854 = vsub.f32 %v852, %v853
    %v855 = vmax.f32 %v854, 0.0
    %v856 = vadd.f32 %v855, 1e-05
    %v857 = vrsqrt.pop %v856
    %v858 = vmul.f32 %v730, %v857
    %v859 = vmul.f32 %v851, %v858
    %v860 = vsub.f32 %v731, %v859
    %v861 = vmul.f32 %v815, %v858
    %v862 = vmul.f32 %v818, %v858
    %v863 = vmul.f32 %v823, %v858
    %v864 = vmul.f32 %v826, %v858
    %v865 = vadd.f32 %v861, %v860
    %v866 = vadd.f32 %v862, %v860
    %v867 = vadd.f32 %v863, %v860
    %v868 = vadd.f32 %v864, %v860
    %v869 = vpack.c.bf16 %v866, %v865
    %v870 = vpack.c.bf16 %v868, %v867
    %v871 = vmax.bf16 %v869, 0
    %v872 = vmax.bf16 %v870, 0
    %v873 = vld [vmem:[#allocation2 + $0x280] sm:$0xf]
    %v874 = vld [vmem:[#allocation2 + $0x288] sm:$0xf]
    %v875 = vld [vmem:[#allocation2 + $0x290] sm:$0xf]
    %v876 = vld [vmem:[#allocation2 + $0x298] sm:$0xf]
    %v877 = vld [vmem:[#allocation2 + $0x2a0] sm:$0xf]
    %v878 = vld [vmem:[#allocation2 + $0x2a8] sm:$0xf]
    %v879 = vld [vmem:[#allocation2 + $0x2b0] sm:$0xf]
    %v880 = vld [vmem:[#allocation2 + $0x2b8] sm:$0xf]
    %v881 = vld [vmem:[#allocation2 + $0x2c0] sm:$0xf]
    %v882 = vld [vmem:[#allocation2 + $0x2c8] sm:$0xf]
    %v883 = vld [vmem:[#allocation2 + $0x2d0] sm:$0xf]
    %v884 = vld [vmem:[#allocation2 + $0x2d8] sm:$0xf]
    %v885 = vld [vmem:[#allocation2 + $0x2e0] sm:$0xf]
    %v886 = vld [vmem:[#allocation2 + $0x2e8] sm:$0xf]
    %v887 = vld [vmem:[#allocation2 + $0x2f0] sm:$0xf]
    %v888 = vld [vmem:[#allocation2 + $0x2f8] sm:$0xf]
    %v889 = vld [vmem:[%s2 + $0x10] ss:$0 sm:$0xff]
    %v906 = vunpack.c.l.b16 %v873
    %v907 = vunpack.c.l.b16 %v874
    %v908 = vunpack.c.l.b16 %v875
    %v909 = vunpack.c.l.b16 %v876
    %v910 = vunpack.c.l.b16 %v877
    %v911 = vunpack.c.l.b16 %v878
    %v912 = vunpack.c.l.b16 %v879
    %v913 = vunpack.c.l.b16 %v880
    %v914 = vunpack.c.l.b16 %v881
    %v915 = vunpack.c.l.b16 %v882
    %v916 = vunpack.c.l.b16 %v883
    %v917 = vunpack.c.l.b16 %v884
    %v918 = vunpack.c.l.b16 %v885
    %v919 = vunpack.c.l.b16 %v886
    %v920 = vunpack.c.l.b16 %v887
    %v921 = vunpack.c.l.b16 %v888
    %v922 = vpack.c.b16 %v907, %v906
    %v923 = vpack.c.b16 %v909, %v908
    %v924 = vpack.c.b16 %v911, %v910
    %v925 = vpack.c.b16 %v913, %v912
    %v926 = vpack.c.b16 %v915, %v914
    %v927 = vpack.c.b16 %v917, %v916
    %v928 = vpack.c.b16 %v919, %v918
    %v929 = vpack.c.b16 %v921, %v920
    %938 = vmatprep.subr.bf16.mxu0 0
    %939 = vmatpush1.bf16.msra.mxu0 %v922
    %940 = vmatprep.subr.bf16.mxu0 0
    %941 = vmatpush1.bf16.msra.mxu0 %v923
    %942 = vmatprep.subr.bf16.mxu0 0
    %943 = vmatpush1.bf16.msra.mxu0 %v924
    %944 = vmatprep.subr.bf16.mxu0 0
    %945 = vmatpush1.bf16.msra.mxu0 %v925
    %946 = vmatprep.subr.bf16.mxu0 0
    %947 = vmatpush1.bf16.msra.mxu0 %v926
    %948 = vmatprep.subr.bf16.mxu0 0
    %949 = vmatpush1.bf16.msra.mxu0 %v927
    %950 = vmatprep.subr.bf16.mxu0 0
    %951 = vmatpush1.bf16.msra.mxu0 %v928
    %952 = vmatprep.subr.bf16.mxu0 0
    %953 = vmatpush1.bf16.msra.mxu0 %v929
    %954 = vmatprep.subr.bf16.mxu0 0
    %955 = vmatpush1.bf16.msra.mxu0 0
    %956 = vmatprep.subr.bf16.mxu0 0
    %957 = vmatpush1.bf16.msra.mxu0 0
    %958 = vmatprep.subr.bf16.mxu0 0
    %959 = vmatpush1.bf16.msra.mxu0 0
    %960 = vmatprep.subr.bf16.mxu0 0
    %961 = vmatpush1.bf16.msra.mxu0 0
    %962 = vmatprep.subr.bf16.mxu0 0
    %963 = vmatpush1.bf16.msra.mxu0 0
    %964 = vmatprep.subr.bf16.mxu0 0
    %965 = vmatpush1.bf16.msra.mxu0 0
    %966 = vmatprep.subr.bf16.mxu0 0
    %967 = vmatpush1.bf16.msra.mxu0 0
    %968 = vmatprep.subr.bf16.mxu0 0
    %969 = vmatpush1.bf16.msra.mxu0 0
    %970 = vmatprep.mubr.bf16.mxu0 0
    %971 = vmatmul.mubr.bf16.gmra.mrb[0].mxu0 %v871
    %v972 = vpop.f32.mrb[0].mxu0
    %v973 = vadd.f32 %v889, %v972
    %v974 = vpop.f32.mrb[0].mxu0
    %v975 = vpop.f32.mrb[0].mxu0
    %v976 = vadd.f32 %v889, %v975
    %v977 = vpop.f32.mrb[0].mxu0
    %978 = vmatprep.mubr.bf16.mxu0 0
    %979 = vmatmul.mubr.bf16.gmra.mrb[0].mxu0 %v872
    %v980 = vpop.f32.mrb[0].mxu0
    %v981 = vadd.f32 %v889, %v980
    %v982 = vpop.f32.mrb[0].mxu0
    %v983 = vpop.f32.mrb[0].mxu0
    %v984 = vadd.f32 %v889, %v983
    %v985 = vpop.f32.mrb[0].mxu0
    %986 = vdwg.mxu0
    %987 = vst [vmem:[%s3] sm:$0xff] %v973
    %988 = vst [vmem:[%s3 + $0x8] sm:$0xff] %v976
    %989 = vst [vmem:[%s3 + $0x10] sm:$0xff] %v981
    %990 = vst [vmem:[%s3 + $0x18] sm:$0xff] %v984
    // Predicated region
    $region18: #{iqn_forward.1} parent=1 // pred_check
      _
    $region19: #{iqn_forward.1} parent=1 // pred_check_branch
      %992 = sbr.rel (0) target = $region21
    $region20: #{iqn_forward.1} parent=1 // pred_region
      _
    $region21: #{iqn_forward.1} parent=1 // pred_fallthru
      _
    // Predicated region
    $region22: #{iqn_forward.1} parent=1 // pred_check
      _
    $region23: #{iqn_forward.1} parent=1 // pred_check_branch
      %994 = sbr.rel (0) target = $region25
    $region24: #{iqn_forward.1} parent=1 // pred_region
      _
    $region25: #{iqn_forward.1} parent=1 // pred_fallthru
      _
    %995 = vsyncpa [#allocation3], 1

</llo_original>
